<compile_context>
chip_gen: v5e
topology: v5e:2x2
jax: 0.10.0
libtpu: 0.0.40
codegen_flags: <defaults>
</compile_context>

<pallas_src>
import functools

import jax
import jax.numpy as jnp
from jax.experimental import pallas as pl
from jax.experimental.pallas import tpu as pltpu


def _cnn_series_kernel(x_ref, w1_ref, b1_ref, w2_ref, b2_ref, wf_ref, bf_ref,
                       out_ref, *, matmul_dtype):
    bb, L, _ = x_ref.shape              # batch block, input length
    L2, L4 = L // 2, L // 4
    c1 = w1_ref.shape[1]                # conv1 out channels
    c2 = w2_ref.shape[1]                # conv2 out channels

    x = x_ref[...]                      # (bb, L, 1)  f32, positions on sublanes

    def mm(a, b):                       # MXU matmul, f32 accumulation
        return jnp.dot(a.astype(matmul_dtype), b.astype(matmul_dtype),
                       preferred_element_type=jnp.float32)

    # ---- conv1 + ReLU (channel-last): 3 shifted whole-row FMAs, no per-position ops.
    zc = jnp.zeros((bb, 1, 1), x.dtype)
    x_prev = jnp.concatenate([zc, x[:, :L - 1, :]], axis=1)      # x[l-1] (zero pad l=0)
    x_next = jnp.concatenate([x[:, 1:, :], zc], axis=1)          # x[l+1] (zero pad l=L-1)
    h1 = jnp.maximum(
        x_prev * w1_ref[0:1, :]                                  # tap t=0
        + x * w1_ref[1:2, :]                                     # tap t=1
        + x_next * w1_ref[2:3, :]                                # tap t=2
        + b1_ref[...],                                           # bias added once
        0.0)                                                     # (bb, L, C1)

    # ---- maxpool1 (k=2, s=2): pairwise max along the position axis, within the slab.
    p1 = jnp.max(h1.reshape(bb, L2, 2, c1), axis=2)              # (bb, L2, C1)

    # ---- conv2 + ReLU: 3 tap-wise MXU matmuls on one fused (bb*L2, C1) operand.
    zr = jnp.zeros((bb, 1, c1), jnp.float32)
    p_prev = jnp.concatenate([zr, p1[:, :L2 - 1, :]], axis=1)    # p1[l-1]
    p_next = jnp.concatenate([p1[:, 1:, :], zr], axis=1)         # p1[l+1]
    acc = (mm(p_prev.reshape(bb * L2, c1), w2_ref[0 * c1:1 * c1, :])
           + mm(p1.reshape(bb * L2, c1), w2_ref[1 * c1:2 * c1, :])
           + mm(p_next.reshape(bb * L2, c1), w2_ref[2 * c1:3 * c1, :]))
    h2 = jnp.maximum(acc + b2_ref[...], 0.0)                     # (bb*L2, C2)

    # ---- maxpool2 + channel-last flatten -> lane-dense (bb, L4*C2) FC operand.
    pooled = jnp.max(h2.reshape(bb, L4, 2, c2), axis=2)          # (bb, L4, C2)
    flat = pooled.reshape(bb, L4 * c2)                           # (bb, L4*C2)

    # ---- FC head: single MXU matmul into a 128-padded lane-dense output block.
    out = mm(flat, wf_ref[...]) + bf_ref[...]                    # (bb, Opad)
    out_ref[...] = out.astype(out_ref.dtype)


def prepare_params(params):
    """One-time torch-layout -> kernel-layout weight re-layout + lane padding.

    Hoisted out of the per-call (jitted) path so no per-call transpose/pad ops remain.
    """
    C1 = params["conv1_w"].shape[0]
    C2 = params["conv2_w"].shape[0]
    O, F = params["fc_w"].shape
    L4 = F // C2
    Opad = ((O + 127) // 128) * 128                              # lane-dense output

    w1 = jnp.transpose(params["conv1_w"][:, 0, :], (1, 0))       # (3, C1)   tap-major
    b1 = params["conv1_b"].reshape(1, C1)
    w2 = jnp.transpose(params["conv2_w"], (2, 1, 0)).reshape(3 * C1, C2)   # (3*C1, C2)
    b2 = params["conv2_b"].reshape(1, C2)
    # torch flattens (B, C2, L4) channel-major; the kernel flattens position-major
    # (lane index = j*C2 + c2), so permute the FC weight rows to match, then pad lanes.
    wf = jnp.transpose(params["fc_w"].reshape(O, C2, L4), (2, 1, 0)).reshape(L4 * C2, O)
    wf = jnp.pad(wf, ((0, 0), (0, Opad - O)))
    bf = jnp.pad(params["fc_b"], (0, Opad - O)).reshape(1, Opad)
    return {"w1": w1, "b1": b1, "w2": w2, "b2": b2, "wf": wf, "bf": bf}


def _pick_batch_tile(B):
    """Batch tile: multiple of 8 when possible (grid pipelining / v7x megacore)."""
    if B % 8 != 0:
        return B                       # full-extent block (toy sizes); single grid step
    bm = 8
    while B % (bm * 2) == 0 and B // (bm * 2) >= 4 and bm < 512:
        bm *= 2
    return bm


def cnn_series_forward(indata, prepped, *, n_output, matmul_dtype=jnp.float32):
    """indata: (B, 1, n_input) f32 -> (B, n_output) f32  (matches CNN_Series.forward)."""
    B, c_in, L = indata.shape
    assert c_in == 1 and L % 4 == 0
    C1 = prepped["w1"].shape[1]
    C2 = prepped["b2"].shape[1]
    Opad = prepped["wf"].shape[1]
    L4 = L // 4
    assert prepped["wf"].shape[0] == L4 * C2

    # Free metadata reshape: positions go on sublanes so the DMA lands x in the layout
    # the channel-last conv math wants (no in-kernel transpose).
    x3 = indata.reshape(B, L, 1)

    bm = _pick_batch_tile(B)
    grid = (B // bm,)
    wspec = lambda i: (0, 0)

    out = pl.pallas_call(
        functools.partial(_cnn_series_kernel, matmul_dtype=matmul_dtype),
        out_shape=jax.ShapeDtypeStruct((B, Opad), jnp.float32),
        grid=grid,
        in_specs=[
            pl.BlockSpec((bm, L, 1), lambda i: (i, 0, 0)),   # x (batch tile)
            pl.BlockSpec((3, C1), wspec),                    # conv1 weight (tap-major)
            pl.BlockSpec((1, C1), wspec),                    # conv1 bias
            pl.BlockSpec((3 * C1, C2), wspec),               # conv2 weight (tap-major rows)
            pl.BlockSpec((1, C2), wspec),                    # conv2 bias
            pl.BlockSpec((L4 * C2, Opad), wspec),            # fc weight (position-major, padded)
            pl.BlockSpec((1, Opad), wspec),                  # fc bias (padded)
        ],
        out_specs=pl.BlockSpec((bm, Opad), lambda i: (i, 0)),
        compiler_params=pltpu.CompilerParams(
            dimension_semantics=("parallel",),               # batch tiles are independent
        ),
    )(x3, prepped["w1"], prepped["b1"], prepped["w2"], prepped["b2"],
      prepped["wf"], prepped["bf"])
    return out[:, :n_output]


def _reference_forward(indata, params):
    """Pure-JAX (XLA) replica of the PyTorch CNN_Series forward, torch-layout params."""
    w1, b1 = params["conv1_w"], params["conv1_b"]
    w2, b2 = params["conv2_w"], params["conv2_b"]
    wf, bf = params["fc_w"], params["fc_b"]

    def conv1d_same(x, w, b):
        dn = jax.lax.conv_dimension_numbers(x.shape, w.shape, ("NCH", "OIH", "NCH"))
        y = jax.lax.conv_general_dilated(
            x, w, window_strides=(1,), padding=[(1, 1)], dimension_numbers=dn,
            precision=jax.lax.Precision.HIGHEST)
        return y + b[None, :, None]

    def maxpool2(x):
        return jax.lax.reduce_window(
            x, -jnp.inf, jax.lax.max,
            window_dimensions=(1, 1, 2), window_strides=(1, 1, 2), padding="VALID")

    h = maxpool2(jax.nn.relu(conv1d_same(indata, w1, b1)))
    h = maxpool2(jax.nn.relu(conv1d_same(h, w2, b2)))
    flat = h.reshape(h.shape[0], -1)                    # (B, C2 * L/4), channel-major
    return jnp.dot(flat, wf.T, precision=jax.lax.Precision.HIGHEST) + bf[None, :]


def init_params(key, n_input, n_hidden1, n_hidden2, n_output):
    """Deterministic torch-layout parameters (Conv1d / Linear shapes)."""
    ks = jax.random.split(key, 6)

    def u(k, shape, fan_in):
        s = 1.0 / jnp.sqrt(jnp.float32(fan_in))
        return jax.random.uniform(k, shape, jnp.float32, -s, s)

    fc_in = n_hidden2 * n_input // 4
    return {
        "conv1_w": u(ks[0], (n_hidden1, 1, 3), 3),
        "conv1_b": u(ks[1], (n_hidden1,), 3),
        "conv2_w": u(ks[2], (n_hidden2, n_hidden1, 3), 3 * n_hidden1),
        "conv2_b": u(ks[3], (n_hidden2,), 3 * n_hidden1),
        "fc_w":   u(ks[4], (n_output, fc_in), fc_in),
        "fc_b":   u(ks[5], (n_output,), fc_in),
    }


if __name__ == "__main__":
    B, L, C1, C2, O = 2, 16, 8, 16, 5          # batch=2, n_input=16, hidden 8/16, out 5

    key = jax.random.PRNGKey(0)
    kx, kp = jax.random.split(key)
    x = jax.random.normal(kx, (B, 1, L), jnp.float32)
    params = init_params(kp, L, C1, C2, O)

    prepped = prepare_params(params)            # one-time re-layout, outside the jit path
    fwd = jax.jit(cnn_series_forward, static_argnames=("n_output", "matmul_dtype"))
    # TODO(synk): on v6e/v7x at production sizes pass matmul_dtype=jnp.bfloat16
    # (f32 accumulation is kept via preferred_element_type) and loosen the tolerance.
    y = fwd(x, prepped, n_output=O)
    jax.block_until_ready(y)

    y_ref = _reference_forward(x, params)
    assert y.shape == (B, O)
    assert jnp.allclose(y, y_ref, atol=2e-3, rtol=2e-3), (y, y_ref)

    print("KERNEL_OK")
</pallas_src>

<mosaic_0001>
module attributes {stable_mosaic.version = 11 : i64} {
  func.func @_cnn_series_kernel(%arg0: i32, %arg1: memref<2x16x1xf32, #tpu.memory_space<vmem>>, %arg2: memref<3x8xf32, #tpu.memory_space<vmem>>, %arg3: memref<1x8xf32, #tpu.memory_space<vmem>>, %arg4: memref<24x16xf32, #tpu.memory_space<vmem>>, %arg5: memref<1x16xf32, #tpu.memory_space<vmem>>, %arg6: memref<64x128xf32, #tpu.memory_space<vmem>>, %arg7: memref<1x128xf32, #tpu.memory_space<vmem>>, %arg8: memref<2x128xf32, #tpu.memory_space<vmem>>) attributes {dimension_semantics = [#tpu.dimension_semantics<parallel>], iteration_bounds = array<i64: 1>, scalar_prefetch = 0 : i64, scratch_operands = 0 : i64, tpu.core_type = #tpu.core_type<tc>, window_params = [{transform_indices = @transform_0, window_bounds = array<i64: 2, 16, 1>}, {pipeline_mode = #tpu.pipeline_mode<synchronous>, transform_indices = @transform_1, window_bounds = array<i64: 3, 8>}, {pipeline_mode = #tpu.pipeline_mode<synchronous>, transform_indices = @transform_2, window_bounds = array<i64: 1, 8>}, {pipeline_mode = #tpu.pipeline_mode<synchronous>, transform_indices = @transform_3, window_bounds = array<i64: 24, 16>}, {pipeline_mode = #tpu.pipeline_mode<synchronous>, transform_indices = @transform_4, window_bounds = array<i64: 1, 16>}, {pipeline_mode = #tpu.pipeline_mode<synchronous>, transform_indices = @transform_5, window_bounds = array<i64: 64, 128>}, {pipeline_mode = #tpu.pipeline_mode<synchronous>, transform_indices = @transform_6, window_bounds = array<i64: 1, 128>}, {transform_indices = @transform_7, window_bounds = array<i64: 2, 128>}]} {
    %c0 = arith.constant 0 : index
    %c0_0 = arith.constant 0 : index
    %c0_1 = arith.constant 0 : index
    %0 = vector.load %arg1[%c0, %c0_0, %c0_1] : memref<2x16x1xf32, #tpu.memory_space<vmem>>, vector<2x16x1xf32>
    %cst = arith.constant 0.000000e+00 : f32
    %1 = vector.broadcast %cst : f32 to vector<2x1x1xf32>
    %2 = vector.extract_strided_slice %0 {offsets = [0, 0, 0], sizes = [2, 15, 1], strides = [1, 1, 1]} : vector<2x16x1xf32> to vector<2x15x1xf32>
    %3 = tpu.concatenate %1, %2 in 1 : vector<2x1x1xf32>, vector<2x15x1xf32> -> vector<2x16x1xf32>
    %4 = vector.extract_strided_slice %0 {offsets = [0, 1, 0], sizes = [2, 15, 1], strides = [1, 1, 1]} : vector<2x16x1xf32> to vector<2x15x1xf32>
    %5 = tpu.concatenate %4, %1 in 1 : vector<2x15x1xf32>, vector<2x1x1xf32> -> vector<2x16x1xf32>
    %c0_2 = arith.constant 0 : index
    %c0_3 = arith.constant 0 : index
    %6 = vector.load %arg2[%c0_2, %c0_3] : memref<3x8xf32, #tpu.memory_space<vmem>>, vector<1x8xf32>
    %7 = vector.shape_cast %6 : vector<1x8xf32> to vector<1x1x8xf32>
    %8 = vector.broadcast %3 : vector<2x16x1xf32> to vector<2x16x8xf32>
    %9 = vector.broadcast %7 : vector<1x1x8xf32> to vector<2x16x8xf32>
    %10 = arith.mulf %8, %9 : vector<2x16x8xf32>
    %c1 = arith.constant 1 : index
    %c0_4 = arith.constant 0 : index
    %11 = vector.load %arg2[%c1, %c0_4] : memref<3x8xf32, #tpu.memory_space<vmem>>, vector<1x8xf32>
    %12 = vector.shape_cast %11 : vector<1x8xf32> to vector<1x1x8xf32>
    %13 = vector.broadcast %0 : vector<2x16x1xf32> to vector<2x16x8xf32>
    %14 = vector.broadcast %12 : vector<1x1x8xf32> to vector<2x16x8xf32>
    %15 = arith.mulf %13, %14 : vector<2x16x8xf32>
    %16 = arith.addf %10, %15 : vector<2x16x8xf32>
    %c2 = arith.constant 2 : index
    %c0_5 = arith.constant 0 : index
    %17 = vector.load %arg2[%c2, %c0_5] : memref<3x8xf32, #tpu.memory_space<vmem>>, vector<1x8xf32>
    %18 = vector.shape_cast %17 : vector<1x8xf32> to vector<1x1x8xf32>
    %19 = vector.broadcast %5 : vector<2x16x1xf32> to vector<2x16x8xf32>
    %20 = vector.broadcast %18 : vector<1x1x8xf32> to vector<2x16x8xf32>
    %21 = arith.mulf %19, %20 : vector<2x16x8xf32>
    %22 = arith.addf %16, %21 : vector<2x16x8xf32>
    %c0_6 = arith.constant 0 : index
    %c0_7 = arith.constant 0 : index
    %23 = vector.load %arg3[%c0_6, %c0_7] : memref<1x8xf32, #tpu.memory_space<vmem>>, vector<1x8xf32>
    %24 = vector.shape_cast %23 : vector<1x8xf32> to vector<1x1x8xf32>
    %25 = vector.broadcast %24 : vector<1x1x8xf32> to vector<2x16x8xf32>
    %26 = arith.addf %22, %25 : vector<2x16x8xf32>
    %cst_8 = arith.constant 0.000000e+00 : f32
    %27 = vector.broadcast %cst_8 : f32 to vector<2x16x8xf32>
    %28 = arith.maximumf %26, %27 : vector<2x16x8xf32>
    %29 = vector.shape_cast %28 : vector<2x16x8xf32> to vector<2x8x2x8xf32>
    %cst_9 = arith.constant dense<0xFF800000> : vector<2x8x8xf32>
    %30 = vector.multi_reduction <maximumf>, %29, %cst_9 [2] : vector<2x8x2x8xf32> to vector<2x8x8xf32>
    %cst_10 = arith.constant 0.000000e+00 : f32
    %31 = vector.broadcast %cst_10 : f32 to vector<2x1x8xf32>
    %32 = vector.extract_strided_slice %30 {offsets = [0, 0, 0], sizes = [2, 7, 8], strides = [1, 1, 1]} : vector<2x8x8xf32> to vector<2x7x8xf32>
    %33 = tpu.concatenate %31, %32 in 1 : vector<2x1x8xf32>, vector<2x7x8xf32> -> vector<2x8x8xf32>
    %34 = vector.extract_strided_slice %30 {offsets = [0, 1, 0], sizes = [2, 7, 8], strides = [1, 1, 1]} : vector<2x8x8xf32> to vector<2x7x8xf32>
    %35 = tpu.concatenate %34, %31 in 1 : vector<2x7x8xf32>, vector<2x1x8xf32> -> vector<2x8x8xf32>
    %36 = vector.shape_cast %33 : vector<2x8x8xf32> to vector<16x8xf32>
    %c0_11 = arith.constant 0 : index
    %c0_12 = arith.constant 0 : index
    %37 = vector.load %arg4[%c0_11, %c0_12] : memref<24x16xf32, #tpu.memory_space<vmem>>, vector<8x16xf32>
    %cst_13 = arith.constant dense<0.000000e+00> : vector<16x16xf32>
    %38 = tpu.matmul %36, %37, %cst_13 {dimension_numbers = #tpu.dot_dimension_numbers<[1], [0], [0], [1], [0, 0, 1, 1], [], []>} : vector<16x8xf32>, vector<8x16xf32>, vector<16x16xf32> -> vector<16x16xf32>
    %39 = vector.shape_cast %30 : vector<2x8x8xf32> to vector<16x8xf32>
    %c8 = arith.constant 8 : index
    %c0_14 = arith.constant 0 : index
    %40 = vector.load %arg4[%c8, %c0_14] : memref<24x16xf32, #tpu.memory_space<vmem>>, vector<8x16xf32>
    %cst_15 = arith.constant dense<0.000000e+00> : vector<16x16xf32>
    %41 = tpu.matmul %39, %40, %cst_15 {dimension_numbers = #tpu.dot_dimension_numbers<[1], [0], [0], [1], [0, 0, 1, 1], [], []>} : vector<16x8xf32>, vector<8x16xf32>, vector<16x16xf32> -> vector<16x16xf32>
    %42 = arith.addf %38, %41 : vector<16x16xf32>
    %43 = vector.shape_cast %35 : vector<2x8x8xf32> to vector<16x8xf32>
    %c16 = arith.constant 16 : index
    %c0_16 = arith.constant 0 : index
    %44 = vector.load %arg4[%c16, %c0_16] : memref<24x16xf32, #tpu.memory_space<vmem>>, vector<8x16xf32>
    %cst_17 = arith.constant dense<0.000000e+00> : vector<16x16xf32>
    %45 = tpu.matmul %43, %44, %cst_17 {dimension_numbers = #tpu.dot_dimension_numbers<[1], [0], [0], [1], [0, 0, 1, 1], [], []>} : vector<16x8xf32>, vector<8x16xf32>, vector<16x16xf32> -> vector<16x16xf32>
    %46 = arith.addf %42, %45 : vector<16x16xf32>
    %c0_18 = arith.constant 0 : index
    %c0_19 = arith.constant 0 : index
    %47 = vector.load %arg5[%c0_18, %c0_19] : memref<1x16xf32, #tpu.memory_space<vmem>>, vector<1x16xf32>
    %48 = vector.broadcast %47 : vector<1x16xf32> to vector<16x16xf32>
    %49 = arith.addf %46, %48 : vector<16x16xf32>
    %cst_20 = arith.constant 0.000000e+00 : f32
    %50 = vector.broadcast %cst_20 : f32 to vector<16x16xf32>
    %51 = arith.maximumf %49, %50 : vector<16x16xf32>
    %52 = vector.shape_cast %51 : vector<16x16xf32> to vector<2x4x2x16xf32>
    %cst_21 = arith.constant dense<0xFF800000> : vector<2x4x16xf32>
    %53 = vector.multi_reduction <maximumf>, %52, %cst_21 [2] : vector<2x4x2x16xf32> to vector<2x4x16xf32>
    %54 = vector.shape_cast %53 : vector<2x4x16xf32> to vector<2x64xf32>
    %c0_22 = arith.constant 0 : index
    %c0_23 = arith.constant 0 : index
    %55 = vector.load %arg6[%c0_22, %c0_23] : memref<64x128xf32, #tpu.memory_space<vmem>>, vector<64x128xf32>
    %cst_24 = arith.constant dense<0.000000e+00> : vector<2x128xf32>
    %56 = tpu.matmul %54, %55, %cst_24 {dimension_numbers = #tpu.dot_dimension_numbers<[1], [0], [0], [1], [0, 0, 1, 1], [], []>} : vector<2x64xf32>, vector<64x128xf32>, vector<2x128xf32> -> vector<2x128xf32>
    %c0_25 = arith.constant 0 : index
    %c0_26 = arith.constant 0 : index
    %57 = vector.load %arg7[%c0_25, %c0_26] : memref<1x128xf32, #tpu.memory_space<vmem>>, vector<1x128xf32>
    %58 = vector.broadcast %57 : vector<1x128xf32> to vector<2x128xf32>
    %59 = arith.addf %56, %58 : vector<2x128xf32>
    %c0_27 = arith.constant 0 : index
    %c0_28 = arith.constant 0 : index
    %60 = vector.load %arg8[%c0_27, %c0_28] : memref<2x128xf32, #tpu.memory_space<vmem>>, vector<2x128xf32>
    tpu.vector_store %arg8[%c0_27, %c0_28], %59 {strides = array<i32>} : memref<2x128xf32, #tpu.memory_space<vmem>>, vector<2x128xf32>,
    return
  }
  func.func @transform_0(%arg0: i32) -> (i32, i32, i32) {
    %c0_i32 = arith.constant 0 : i32
    %c0_i32_0 = arith.constant 0 : i32
    %c0_i32_1 = arith.constant 0 : i32
    return %arg0, %c0_i32, %c0_i32_0 : i32, i32, i32
  }
  func.func @transform_1(%arg0: i32) -> (i32, i32) {
    %c0_i32 = arith.constant 0 : i32
    %c0_i32_0 = arith.constant 0 : i32
    %c0_i32_1 = arith.constant 0 : i32
    return %c0_i32, %c0_i32_0 : i32, i32
  }
  func.func @transform_2(%arg0: i32) -> (i32, i32) {
    %c0_i32 = arith.constant 0 : i32
    %c0_i32_0 = arith.constant 0 : i32
    %c0_i32_1 = arith.constant 0 : i32
    return %c0_i32, %c0_i32_0 : i32, i32
  }
  func.func @transform_3(%arg0: i32) -> (i32, i32) {
    %c0_i32 = arith.constant 0 : i32
    %c0_i32_0 = arith.constant 0 : i32
    %c0_i32_1 = arith.constant 0 : i32
    return %c0_i32, %c0_i32_0 : i32, i32
  }
  func.func @transform_4(%arg0: i32) -> (i32, i32) {
    %c0_i32 = arith.constant 0 : i32
    %c0_i32_0 = arith.constant 0 : i32
    %c0_i32_1 = arith.constant 0 : i32
    return %c0_i32, %c0_i32_0 : i32, i32
  }
  func.func @transform_5(%arg0: i32) -> (i32, i32) {
    %c0_i32 = arith.constant 0 : i32
    %c0_i32_0 = arith.constant 0 : i32
    %c0_i32_1 = arith.constant 0 : i32
    return %c0_i32, %c0_i32_0 : i32, i32
  }
  func.func @transform_6(%arg0: i32) -> (i32, i32) {
    %c0_i32 = arith.constant 0 : i32
    %c0_i32_0 = arith.constant 0 : i32
    %c0_i32_1 = arith.constant 0 : i32
    return %c0_i32, %c0_i32_0 : i32, i32
  }
  func.func @transform_7(%arg0: i32) -> (i32, i32) {
    %c0_i32 = arith.constant 0 : i32
    %c0_i32_0 = arith.constant 0 : i32
    return %arg0, %c0_i32 : i32, i32
  }
}

</mosaic_0001>

<llo_original>
// kernel: cnn_series_forward.1
$region0: #{cnn_series_forward.1}
  #allocation0 [shape = 'u32[]', space=smem, size = 0x4, offset = 0x4, fixed_abs, tag = 'smem constant byte address 0x4 - core index']
  #allocation1 [shape = 'u32[72,128]{1,0:T(1,128)}', space=vmem, size = 0x9000, scoped, tag = 'internal scratch']
  %s0 = inlined_call_operand.vmem [shape: f32[2,16,1], index: 0, kind: input, shape index: {}]
  %s1 = inlined_call_operand.vmem [shape: f32[3,8], index: 1, kind: input, shape index: {}]
  %s2 = inlined_call_operand.vmem [shape: f32[1,8], index: 2, kind: input, shape index: {}]
  %s3 = inlined_call_operand.vmem [shape: f32[24,16], index: 3, kind: input, shape index: {}]
  %s4 = inlined_call_operand.vmem [shape: f32[1,16], index: 4, kind: input, shape index: {}]
  %s5 = inlined_call_operand.vmem [shape: f32[64,128], index: 5, kind: input, shape index: {}]
  %s6 = inlined_call_operand.vmem [shape: f32[1,128], index: 6, kind: input, shape index: {}]
  %s7 = inlined_call_operand.hbm [shape: f32[2,128], index: 7, kind: output, shape index: {}]
  %s8 = sld [smem:[#allocation0]]
  $region38: #{cnn_series_forward.1} parent=0
    _
  %s10 = ssub.s32 1, %s8
  %s11 = scalar_select 0, %s10, %s8
  $region1: #{cnn_series_forward.1} parent=0
    #allocation2 [shape = 'u8[1024]{0}', space=vmem, size = 0x400, scoped, tag = 'output window, operand 0, single buffered']
    #allocation3 [shape = 's32[1]{0}', space=sflag, size = 0x4, scoped, tag = 'scoped memory for cnn_series_forward.1']
    %12 = vsyncpa [#allocation3], 0
    // Predicated region
    $region2: #{cnn_series_forward.1} parent=1 // pred_check
      _
    $region3: #{cnn_series_forward.1} parent=1 // pred_check_branch
      %14 = sbr.rel (0) target = $region5
    $region4: #{cnn_series_forward.1} parent=1 // pred_region
      _
    $region5: #{cnn_series_forward.1} parent=1 // pred_fallthru
      _
    // Predicated region
    $region6: #{cnn_series_forward.1} parent=1 // pred_check
      _
    $region7: #{cnn_series_forward.1} parent=1 // pred_check_branch
      %16 = sbr.rel (0) target = $region9
    $region8: #{cnn_series_forward.1} parent=1 // pred_region
      _
    $region9: #{cnn_series_forward.1} parent=1 // pred_fallthru
      _
    // Predicated region
    $region10: #{cnn_series_forward.1} parent=1 // pred_check
      _
    $region11: #{cnn_series_forward.1} parent=1 // pred_check_branch
      %18 = sbr.rel (0) target = $region13
    $region12: #{cnn_series_forward.1} parent=1 // pred_region
      _
    $region13: #{cnn_series_forward.1} parent=1 // pred_fallthru
      _
    // Predicated region
    $region14: #{cnn_series_forward.1} parent=1 // pred_check
      _
    $region15: #{cnn_series_forward.1} parent=1 // pred_check_branch
      %20 = sbr.rel (0) target = $region17
    $region16: #{cnn_series_forward.1} parent=1 // pred_region
      _
    $region17: #{cnn_series_forward.1} parent=1 // pred_fallthru
      _
    // Predicated region
    $region18: #{cnn_series_forward.1} parent=1 // pred_check
      _
    $region19: #{cnn_series_forward.1} parent=1 // pred_check_branch
      %22 = sbr.rel (0) target = $region21
    $region20: #{cnn_series_forward.1} parent=1 // pred_region
      _
    $region21: #{cnn_series_forward.1} parent=1 // pred_fallthru
      _
    // Predicated region
    $region22: #{cnn_series_forward.1} parent=1 // pred_check
      _
    $region23: #{cnn_series_forward.1} parent=1 // pred_check_branch
      %24 = sbr.rel (0) target = $region25
    $region24: #{cnn_series_forward.1} parent=1 // pred_region
      _
    $region25: #{cnn_series_forward.1} parent=1 // pred_fallthru
      _
    // Predicated region
    $region26: #{cnn_series_forward.1} parent=1 // pred_check
      _
    $region27: #{cnn_series_forward.1} parent=1 // pred_check_branch
      %26 = sbr.rel (0) target = $region29
    $region28: #{cnn_series_forward.1} parent=1 // pred_region
      _
    $region29: #{cnn_series_forward.1} parent=1 // pred_fallthru
      _
    %v27 = vld [vmem:[%s0] sm:$0xff]
    %v28 = vld [vmem:[%s0 + $0x8] sm:$0xff]
    %v29 = vld [vmem:[%s0 + $0x10] sm:$0xff]
    %v30 = vld [vmem:[%s0 + $0x18] sm:$0xff]
    %vm35 = vcmask 1040384
    %v36 = vrot.slane %v27, 7
    %v37 = vrot.slane %v28, 7
    %v38 = vsel %vm35, %v36, %v37
    %v39 = vrot.slane %v29, 7
    %v40 = vrot.slane %v30, 7
    %v41 = vsel %vm35, %v39, %v40
    %v44 = vsel %vm35, 0.0, %v36
    %v45 = vsel %vm35, 0.0, %v39
    %vm46 = vcmask 1046528
    %v47 = vrot.slane %v27, 1
    %v48 = vrot.slane %v28, 1
    %v49 = vsel %vm46, %v47, %v48
    %v50 = vrot.slane %v29, 1
    %v51 = vrot.slane %v30, 1
    %v52 = vsel %vm46, %v50, %v51
    %v55 = vsel %vm46, %v48, 0.0
    %v56 = vsel %vm46, %v51, 0.0
    %v57 = vld [vmem:[%s1] sm:$0x1]
    %59 = vset.pattern.permute.xlu0 0
    %60 = vperm.xlu0 %59, %v44
    %v61 = vpop.permute.xlu0 %60
    %63 = vset.pattern.permute.xlu0 0
    %64 = vperm.xlu0 %63, %v38
    %v65 = vpop.permute.xlu0 %64
    %68 = vset.pattern.permute.xlu0 0
    %69 = vperm.xlu0 %68, %v45
    %v70 = vpop.permute.xlu0 %69
    %72 = vset.pattern.permute.xlu0 0
    %73 = vperm.xlu0 %72, %v41
    %v74 = vpop.permute.xlu0 %73
    %v76 = vperm.slane %v57, 0
    %v77 = vmul.f32 %v61, %v76
    %v78 = vmul.f32 %v65, %v76
    %v79 = vmul.f32 %v70, %v76
    %v80 = vmul.f32 %v74, %v76
    %v81 = vld [vmem:[%s1 + $0x1] sm:$0x1]
    %82 = vset.pattern.permute.xlu0 0
    %83 = vperm.xlu0 %82, %v27
    %v84 = vpop.permute.xlu0 %83
    %86 = vset.pattern.permute.xlu0 0
    %87 = vperm.xlu0 %86, %v28
    %v88 = vpop.permute.xlu0 %87
    %90 = vset.pattern.permute.xlu0 0
    %91 = vperm.xlu0 %90, %v29
    %v92 = vpop.permute.xlu0 %91
    %94 = vset.pattern.permute.xlu0 0
    %95 = vperm.xlu0 %94, %v30
    %v96 = vpop.permute.xlu0 %95
    %v98 = vperm.slane %v81, 0
    %v99 = vmul.f32 %v84, %v98
    %v100 = vmul.f32 %v88, %v98
    %v101 = vmul.f32 %v92, %v98
    %v102 = vmul.f32 %v96, %v98
    %v103 = vadd.f32 %v77, %v99
    %v104 = vadd.f32 %v78, %v100
    %v105 = vadd.f32 %v79, %v101
    %v106 = vadd.f32 %v80, %v102
    %v107 = vld [vmem:[%s1 + $0x2] sm:$0x1]
    %108 = vset.pattern.permute.xlu0 0
    %109 = vperm.xlu0 %108, %v49
    %v110 = vpop.permute.xlu0 %109
    %113 = vset.pattern.permute.xlu0 0
    %114 = vperm.xlu0 %113, %v55
    %v115 = vpop.permute.xlu0 %114
    %117 = vset.pattern.permute.xlu0 0
    %118 = vperm.xlu0 %117, %v52
    %v119 = vpop.permute.xlu0 %118
    %122 = vset.pattern.permute.xlu0 0
    %123 = vperm.xlu0 %122, %v56
    %v124 = vpop.permute.xlu0 %123
    %v126 = vperm.slane %v107, 0
    %v127 = vmul.f32 %v110, %v126
    %v128 = vmul.f32 %v115, %v126
    %v129 = vmul.f32 %v119, %v126
    %v130 = vmul.f32 %v124, %v126
    %v131 = vadd.f32 %v103, %v127
    %v132 = vadd.f32 %v104, %v128
    %v133 = vadd.f32 %v105, %v129
    %v134 = vadd.f32 %v106, %v130
    %v135 = vld [vmem:[%s2] sm:$0x1]
    %v137 = vperm.slane %v135, 0
    %v139 = vadd.f32 %v131, %v137
    %v140 = vadd.f32 %v132, %v137
    %v141 = vadd.f32 %v133, %v137
    %v142 = vadd.f32 %v134, %v137
    %v143 = vmax.f32 %v139, 0.0
    %v144 = vmax.f32 %v140, 0.0
    %v145 = vmax.f32 %v141, 0.0
    %v146 = vmax.f32 %v142, 0.0
    %v151 = vrot.slane %v143, 2
    %v152 = vrot.slane %v143, 4
    %v153 = vrot.slane %v143, 6
    %v154 = vrot.slane %v144, 2
    %v155 = vrot.slane %v144, 4
    %v156 = vrot.slane %v144, 6
    %v157 = vrot.slane %v145, 2
    %v158 = vrot.slane %v145, 4
    %v159 = vrot.slane %v145, 6
    %v160 = vrot.slane %v146, 2
    %v161 = vrot.slane %v146, 4
    %v162 = vrot.slane %v146, 6
    %vm175 = vcmask 58368
    %v176 = vsel %vm175, %v143, -inf
    %v177 = vrot.slane %v176, 4
    %v178 = vmax.f32 %v176, %v177
    %v179 = vrot.slane %v178, 2
    %v180 = vmax.f32 %v178, %v179
    %v181 = vrot.slane %v180, 1
    %v182 = vmax.f32 %v180, %v181
    %v183 = vsel %vm175, %v151, -inf
    %v184 = vrot.slane %v183, 4
    %v185 = vmax.f32 %v183, %v184
    %v186 = vrot.slane %v185, 2
    %v187 = vmax.f32 %v185, %v186
    %v188 = vrot.slane %v187, 1
    %v189 = vmax.f32 %v187, %v188
    %v190 = vsel %vm175, %v152, -inf
    %v191 = vrot.slane %v190, 4
    %v192 = vmax.f32 %v190, %v191
    %v193 = vrot.slane %v192, 2
    %v194 = vmax.f32 %v192, %v193
    %v195 = vrot.slane %v194, 1
    %v196 = vmax.f32 %v194, %v195
    %v197 = vsel %vm175, %v153, -inf
    %v198 = vrot.slane %v197, 4
    %v199 = vmax.f32 %v197, %v198
    %v200 = vrot.slane %v199, 2
    %v201 = vmax.f32 %v199, %v200
    %v202 = vrot.slane %v201, 1
    %v203 = vmax.f32 %v201, %v202
    %v204 = vsel %vm175, %v144, -inf
    %v205 = vrot.slane %v204, 4
    %v206 = vmax.f32 %v204, %v205
    %v207 = vrot.slane %v206, 2
    %v208 = vmax.f32 %v206, %v207
    %v209 = vrot.slane %v208, 1
    %v210 = vmax.f32 %v208, %v209
    %v211 = vsel %vm175, %v154, -inf
    %v212 = vrot.slane %v211, 4
    %v213 = vmax.f32 %v211, %v212
    %v214 = vrot.slane %v213, 2
    %v215 = vmax.f32 %v213, %v214
    %v216 = vrot.slane %v215, 1
    %v217 = vmax.f32 %v215, %v216
    %v218 = vsel %vm175, %v155, -inf
    %v219 = vrot.slane %v218, 4
    %v220 = vmax.f32 %v218, %v219
    %v221 = vrot.slane %v220, 2
    %v222 = vmax.f32 %v220, %v221
    %v223 = vrot.slane %v222, 1
    %v224 = vmax.f32 %v222, %v223
    %v225 = vsel %vm175, %v156, -inf
    %v226 = vrot.slane %v225, 4
    %v227 = vmax.f32 %v225, %v226
    %v228 = vrot.slane %v227, 2
    %v229 = vmax.f32 %v227, %v228
    %v230 = vrot.slane %v229, 1
    %v231 = vmax.f32 %v229, %v230
    %v232 = vsel %vm175, %v145, -inf
    %v233 = vrot.slane %v232, 4
    %v234 = vmax.f32 %v232, %v233
    %v235 = vrot.slane %v234, 2
    %v236 = vmax.f32 %v234, %v235
    %v237 = vrot.slane %v236, 1
    %v238 = vmax.f32 %v236, %v237
    %v239 = vsel %vm175, %v157, -inf
    %v240 = vrot.slane %v239, 4
    %v241 = vmax.f32 %v239, %v240
    %v242 = vrot.slane %v241, 2
    %v243 = vmax.f32 %v241, %v242
    %v244 = vrot.slane %v243, 1
    %v245 = vmax.f32 %v243, %v244
    %v246 = vsel %vm175, %v158, -inf
    %v247 = vrot.slane %v246, 4
    %v248 = vmax.f32 %v246, %v247
    %v249 = vrot.slane %v248, 2
    %v250 = vmax.f32 %v248, %v249
    %v251 = vrot.slane %v250, 1
    %v252 = vmax.f32 %v250, %v251
    %v253 = vsel %vm175, %v159, -inf
    %v254 = vrot.slane %v253, 4
    %v255 = vmax.f32 %v253, %v254
    %v256 = vrot.slane %v255, 2
    %v257 = vmax.f32 %v255, %v256
    %v258 = vrot.slane %v257, 1
    %v259 = vmax.f32 %v257, %v258
    %v260 = vsel %vm175, %v146, -inf
    %v261 = vrot.slane %v260, 4
    %v262 = vmax.f32 %v260, %v261
    %v263 = vrot.slane %v262, 2
    %v264 = vmax.f32 %v262, %v263
    %v265 = vrot.slane %v264, 1
    %v266 = vmax.f32 %v264, %v265
    %v267 = vsel %vm175, %v160, -inf
    %v268 = vrot.slane %v267, 4
    %v269 = vmax.f32 %v267, %v268
    %v270 = vrot.slane %v269, 2
    %v271 = vmax.f32 %v269, %v270
    %v272 = vrot.slane %v271, 1
    %v273 = vmax.f32 %v271, %v272
    %v274 = vsel %vm175, %v161, -inf
    %v275 = vrot.slane %v274, 4
    %v276 = vmax.f32 %v274, %v275
    %v277 = vrot.slane %v276, 2
    %v278 = vmax.f32 %v276, %v277
    %v279 = vrot.slane %v278, 1
    %v280 = vmax.f32 %v278, %v279
    %v281 = vsel %vm175, %v162, -inf
    %v282 = vrot.slane %v281, 4
    %v283 = vmax.f32 %v281, %v282
    %v284 = vrot.slane %v283, 2
    %v285 = vmax.f32 %v283, %v284
    %v286 = vrot.slane %v285, 1
    %v287 = vmax.f32 %v285, %v286
    %vm302 = vcmask 1042434
    %v303 = vsel %vm302, %v189, %v182
    %vm304 = vcmask 1043459
    %v305 = vsel %vm304, %v196, %v303
    %vm306 = vcmask 1044484
    %v307 = vsel %vm306, %v203, %v305
    %vm308 = vcmask 1045509
    %v309 = vsel %vm308, %v210, %v307
    %vm310 = vcmask 1046534
    %v311 = vsel %vm310, %v217, %v309
    %vm312 = vcmask 1047559
    %v313 = vsel %vm312, %v224, %v311
    %v314 = vsel %vm302, %v245, %v238
    %v315 = vsel %vm304, %v252, %v314
    %v316 = vsel %vm306, %v259, %v315
    %v317 = vsel %vm308, %v266, %v316
    %v318 = vsel %vm310, %v273, %v317
    %v319 = vsel %vm312, %v280, %v318
    %v322 = vsel %vm35, 0.0, %v313
    %v323 = vsel %vm35, 0.0, %v319
    %vm326 = vcmask 1041409
    %v327 = vsel %vm326, %v196, %v189
    %v328 = vsel %vm302, %v203, %v327
    %v329 = vsel %vm304, %v210, %v328
    %v330 = vsel %vm306, %v217, %v329
    %v331 = vsel %vm308, %v224, %v330
    %v332 = vsel %vm310, %v231, %v331
    %v333 = vsel %vm326, %v252, %v245
    %v334 = vsel %vm302, %v259, %v333
    %v335 = vsel %vm304, %v266, %v334
    %v336 = vsel %vm306, %v273, %v335
    %v337 = vsel %vm308, %v280, %v336
    %v338 = vsel %vm310, %v287, %v337
    %v341 = vsel %vm46, %v332, 0.0
    %v342 = vsel %vm46, %v338, 0.0
    %v343 = vld [vmem:[%s3] sm:$0xff]
    %v344 = vld [vmem:[%s3 + $0x8] sm:$0xff]
    %v345 = vsel %vm326, %v189, %v182
    %v346 = vsel %vm302, %v196, %v345
    %v347 = vsel %vm304, %v203, %v346
    %v348 = vsel %vm306, %v210, %v347
    %v349 = vsel %vm308, %v217, %v348
    %v350 = vsel %vm310, %v224, %v349
    %v351 = vsel %vm312, %v231, %v350
    %v352 = vsel %vm326, %v245, %v238
    %v353 = vsel %vm302, %v252, %v352
    %v354 = vsel %vm304, %v259, %v353
    %v355 = vsel %vm306, %v266, %v354
    %v356 = vsel %vm308, %v273, %v355
    %v357 = vsel %vm310, %v280, %v356
    %v358 = vsel %vm312, %v287, %v357
    %vm359 = vcmask 64512
    %v360 = vsel %vm359, %v351, 0
    %v362 = vsel %vm359, %v358, 0
    %364 = vmatpush.msra.mxu0 0.0
    %365 = vmatpush.msra.mxu0 0.0
    %366 = vmatpush.msra.mxu0 0.0
    %367 = vmatpush.msra.mxu0 0.0
    %368 = vmatpush.msra.mxu0 0.0
    %369 = vmatpush.msra.mxu0 0.0
    %370 = vmatpush.msra.mxu0 0.0
    %371 = vmatpush.msra.mxu0 0.0
    %372 = vmatpush.msra.mxu0 0.0
    %373 = vmatpush.msra.mxu0 0.0
    %374 = vmatpush.msra.mxu0 0.0
    %375 = vmatpush.msra.mxu0 0.0
    %376 = vmatpush.msra.mxu0 0.0
    %377 = vmatpush.msra.mxu0 0.0
    %378 = vmatpush.msra.mxu0 0.0
    %379 = vmatpush.msra.mxu0 %v344
    %380 = vmatmul.f32.gmra.mxu0 %v360
    %v381 = vpop.f32.mrf.mxu0
    %v382 = vadd.f32 0.0, %v381
    %383 = vmatmul.f32.gmra.mxu0 %v362
    %v384 = vpop.f32.mrf.mxu0
    %v385 = vadd.f32 0.0, %v384
    %386 = vdwg.mxu0
    %v388 = vsel %vm359, %v322, 0
    %v391 = vsel %vm359, %v323, 0
    %393 = vmatpush.msra.mxu0 0.0
    %394 = vmatpush.msra.mxu0 0.0
    %395 = vmatpush.msra.mxu0 0.0
    %396 = vmatpush.msra.mxu0 0.0
    %397 = vmatpush.msra.mxu0 0.0
    %398 = vmatpush.msra.mxu0 0.0
    %399 = vmatpush.msra.mxu0 0.0
    %400 = vmatpush.msra.mxu0 0.0
    %401 = vmatpush.msra.mxu0 0.0
    %402 = vmatpush.msra.mxu0 0.0
    %403 = vmatpush.msra.mxu0 0.0
    %404 = vmatpush.msra.mxu0 0.0
    %405 = vmatpush.msra.mxu0 0.0
    %406 = vmatpush.msra.mxu0 0.0
    %407 = vmatpush.msra.mxu0 0.0
    %408 = vmatpush.msra.mxu0 %v343
    %409 = vmatmul.f32.gmra.mxu0 %v388
    %v410 = vpop.f32.mrf.mxu0
    %v411 = vadd.f32 %v382, %v410
    %412 = vmatmul.f32.gmra.mxu0 %v391
    %v413 = vpop.f32.mrf.mxu0
    %v414 = vadd.f32 %v385, %v413
    %415 = vdwg.mxu0
    %v416 = vld [vmem:[%s3 + $0x10] sm:$0xff]
    %v418 = vsel %vm359, %v341, 0
    %v421 = vsel %vm359, %v342, 0
    %423 = vmatpush.msra.mxu0 0.0
    %424 = vmatpush.msra.mxu0 0.0
    %425 = vmatpush.msra.mxu0 0.0
    %426 = vmatpush.msra.mxu0 0.0
    %427 = vmatpush.msra.mxu0 0.0
    %428 = vmatpush.msra.mxu0 0.0
    %429 = vmatpush.msra.mxu0 0.0
    %430 = vmatpush.msra.mxu0 0.0
    %431 = vmatpush.msra.mxu0 0.0
    %432 = vmatpush.msra.mxu0 0.0
    %433 = vmatpush.msra.mxu0 0.0
    %434 = vmatpush.msra.mxu0 0.0
    %435 = vmatpush.msra.mxu0 0.0
    %436 = vmatpush.msra.mxu0 0.0
    %437 = vmatpush.msra.mxu0 0.0
    %438 = vmatpush.msra.mxu0 %v416
    %439 = vmatmul.f32.gmra.mxu0 %v418
    %v440 = vpop.f32.mrf.mxu0
    %v441 = vadd.f32 0.0, %v440
    %442 = vmatmul.f32.gmra.mxu0 %v421
    %v443 = vpop.f32.mrf.mxu0
    %v444 = vadd.f32 0.0, %v443
    %445 = vdwg.mxu0
    %v446 = vadd.f32 %v411, %v441
    %v447 = vadd.f32 %v414, %v444
    %v448 = vld [vmem:[%s4] sm:$0x1]
    %v450 = vperm.slane %v448, 0
    %v452 = vadd.f32 %v446, %v450
    %v453 = vadd.f32 %v447, %v450
    %v454 = vmax.f32 %v452, 0.0
    %v455 = vmax.f32 %v453, 0.0
    %v458 = vrot.slane %v454, 2
    %v459 = vrot.slane %v454, 4
    %v460 = vrot.slane %v454, 6
    %v461 = vrot.slane %v455, 2
    %v462 = vrot.slane %v455, 4
    %v463 = vrot.slane %v455, 6
    %vm470 = vcmask 123904
    %v471 = vsel %vm470, %v454, -inf
    %v472 = vrot.slane %v471, 4
    %v473 = vmax.f32 %v471, %v472
    %v474 = vrot.slane %v473, 2
    %v475 = vmax.f32 %v473, %v474
    %v476 = vrot.slane %v475, 1
    %v477 = vmax.f32 %v475, %v476
    %v478 = vsel %vm470, %v458, -inf
    %v479 = vrot.slane %v478, 4
    %v480 = vmax.f32 %v478, %v479
    %v481 = vrot.slane %v480, 2
    %v482 = vmax.f32 %v480, %v481
    %v483 = vrot.slane %v482, 1
    %v484 = vmax.f32 %v482, %v483
    %v485 = vsel %vm470, %v459, -inf
    %v486 = vrot.slane %v485, 4
    %v487 = vmax.f32 %v485, %v486
    %v488 = vrot.slane %v487, 2
    %v489 = vmax.f32 %v487, %v488
    %v490 = vrot.slane %v489, 1
    %v491 = vmax.f32 %v489, %v490
    %v492 = vsel %vm470, %v460, -inf
    %v493 = vrot.slane %v492, 4
    %v494 = vmax.f32 %v492, %v493
    %v495 = vrot.slane %v494, 2
    %v496 = vmax.f32 %v494, %v495
    %v497 = vrot.slane %v496, 1
    %v498 = vmax.f32 %v496, %v497
    %v499 = vsel %vm470, %v455, -inf
    %v500 = vrot.slane %v499, 4
    %v501 = vmax.f32 %v499, %v500
    %v502 = vrot.slane %v501, 2
    %v503 = vmax.f32 %v501, %v502
    %v504 = vrot.slane %v503, 1
    %v505 = vmax.f32 %v503, %v504
    %v506 = vsel %vm470, %v461, -inf
    %v507 = vrot.slane %v506, 4
    %v508 = vmax.f32 %v506, %v507
    %v509 = vrot.slane %v508, 2
    %v510 = vmax.f32 %v508, %v509
    %v511 = vrot.slane %v510, 1
    %v512 = vmax.f32 %v510, %v511
    %v513 = vsel %vm470, %v462, -inf
    %v514 = vrot.slane %v513, 4
    %v515 = vmax.f32 %v513, %v514
    %v516 = vrot.slane %v515, 2
    %v517 = vmax.f32 %v515, %v516
    %v518 = vrot.slane %v517, 1
    %v519 = vmax.f32 %v517, %v518
    %v520 = vsel %vm470, %v463, -inf
    %v521 = vrot.slane %v520, 4
    %v522 = vmax.f32 %v520, %v521
    %v523 = vrot.slane %v522, 2
    %v524 = vmax.f32 %v522, %v523
    %v525 = vrot.slane %v524, 1
    %v526 = vmax.f32 %v524, %v525
    %v535 = vsel %vm326, %v484, %v477
    %v536 = vsel %vm302, %v491, %v535
    %v537 = vsel %vm304, %v498, %v536
    %v538 = vsel %vm326, %v512, %v505
    %v539 = vsel %vm302, %v519, %v538
    %v540 = vsel %vm304, %v526, %v539
    %v543 = vunpack.c.l.s4 1983009808
    %v544 = vunpack.c.0.s8 %v543
    %v545 = vperm.slane %v537, %v544
    %v548 = vunpack.c.l.s4 1983009808
    %v549 = vunpack.c.0.s8 %v548
    %v550 = vperm.slane %v540, %v549
    %v551 = vrot.slane %v550, 4
    %vm552 = vcmask 1047556
    %v553 = vsel %vm552, %v551, %v545
    %v554 = vrot.slane %v545, 4
    %v555 = vsel %vm552, %v550, %v554
    %v557 = vunpack.c.l.s4 1934713408
    %v558 = vunpack.c.0.s8 %v557
    %v559 = vperm.slane %v553, %v558
    %v561 = vunpack.c.l.s4 1934713408
    %v562 = vunpack.c.0.s8 %v561
    %v563 = vperm.slane %v555, %v562
    %v564 = vrot.slane %v559, 4
    %v565 = vsel %vm552, 0.0, %v564
    %v566 = vrot.slane %v563, 4
    %v567 = vsel %vm552, 0.0, %v566
    %569 = vrot.lane.b32.xlu0 %v565, 16
    %v570 = vpop.permute.xlu0 %569
    %573 = vrot.lane.b32.xlu0 %v563, 32
    %v574 = vpop.permute.xlu0 %573
    %577 = vrot.lane.b32.xlu0 %v567, 48
    %v578 = vpop.permute.xlu0 %577
    %vm580 = vcmask 130048
    %v581 = vsel %vm580, %v559, %v570
    %vm582 = vcmask 261120
    %v583 = vsel %vm582, %v581, %v574
    %vm584 = vcmask 392192
    %v585 = vsel %vm584, %v583, %v578
    %v586 = vld [vmem:[%s5] sm:$0xff]
    %v587 = vld [vmem:[%s5 + $0x8] sm:$0xff]
    %v588 = vld [vmem:[%s5 + $0x10] sm:$0xff]
    %v589 = vld [vmem:[%s5 + $0x18] sm:$0xff]
    %v590 = vld [vmem:[%s5 + $0x20] sm:$0xff]
    %v591 = vld [vmem:[%s5 + $0x28] sm:$0xff]
    %v592 = vld [vmem:[%s5 + $0x30] sm:$0xff]
    %v593 = vld [vmem:[%s5 + $0x38] sm:$0xff]
    %v594 = vld [vmem:[%s6] sm:$0x1]
    %v596 = vperm.slane %v594, 0
    %vm598 = vcmask 523264
    %v600 = vsel %vm598, %v585, 0
    %602 = vmatpush.msra.mxu0 0.0
    %603 = vmatpush.msra.mxu0 0.0
    %604 = vmatpush.msra.mxu0 0.0
    %605 = vmatpush.msra.mxu0 0.0
    %606 = vmatpush.msra.mxu0 0.0
    %607 = vmatpush.msra.mxu0 0.0
    %608 = vmatpush.msra.mxu0 0.0
    %609 = vmatpush.msra.mxu0 0.0
    %610 = vmatpush.msra.mxu0 %v593
    %611 = vmatpush.msra.mxu0 %v592
    %612 = vmatpush.msra.mxu0 %v591
    %613 = vmatpush.msra.mxu0 %v590
    %614 = vmatpush.msra.mxu0 %v589
    %615 = vmatpush.msra.mxu0 %v588
    %616 = vmatpush.msra.mxu0 %v587
    %617 = vmatpush.msra.mxu0 %v586
    %618 = vmatmul.f32.gmra.mxu0 %v600
    %v619 = vpop.f32.mrf.mxu0
    %v620 = vadd.f32 %v596, %v619
    %621 = vdwg.mxu0
    %622 = vst [vmem:[#allocation2] sm:$0x3] %v620
    // Predicated region
    $region30: #{cnn_series_forward.1} parent=1 // pred_check
      _
    $region31: #{cnn_series_forward.1} parent=1 // pred_check_branch
      %624 = sbr.rel (0) target = $region33
    $region32: #{cnn_series_forward.1} parent=1 // pred_region
      %626 = vsyncadd [#allocation3], 0
      %s628 = sshll.u32 [#allocation2], 4
      %s629 = int_to_ptr.vmem [resolvable:$true] %s628
      %s630 = sshll.u32 %s7, 4
      %s631 = int_to_ptr.hbm [resolvable:$true] %s630
      %633 = dma.vmem_to_hbm [thread:$0]  %s629, 32, %s631, [#allocation3]
    $region33: #{cnn_series_forward.1} parent=1 // pred_fallthru
      _
    // Predicated region
    $region34: #{cnn_series_forward.1} parent=1 // pred_check
      _
    $region35: #{cnn_series_forward.1} parent=1 // pred_check_branch
      %635 = sbr.rel (0) target = $region37
    $region36: #{cnn_series_forward.1} parent=1 // pred_region
      %637 = dma.done [#allocation3], 32
    $region37: #{cnn_series_forward.1} parent=1 // pred_fallthru
      _
    %638 = vsyncpa [#allocation3], 1

</llo_original>
